<compile_context>
chip_gen: v5e
topology: v5e:2x2
jax: 0.10.0
libtpu: 0.0.40
codegen_flags: <defaults>
</compile_context>

<pallas_src>
import functools

import jax
import jax.numpy as jnp
from jax.experimental import pallas as pl
from jax.experimental.pallas import tpu as pltpu


def _round_up(x, m):
    return ((x + m - 1) // m) * m


def intra_decoder_attn_kernel(prev_ref, dec_ref, wprevT_ref, v_ref, ct_ref, *,
                              t_true: int):
    Bt, Tp, H = prev_ref.shape
    prev = prev_ref[...]                                        # (Bt, Tp, H)

    # One big (Bt*Tp, H) @ (H, H) matmul on the MXU. W_prev is pre-transposed
    # in the wrapper so no in-kernel transpose; Tp is padded to a multiple of 8
    # so the flatten / unflatten is layout-free for f32.
    et = jnp.dot(prev.reshape(Bt * Tp, H), wprevT_ref[...],
                 preferred_element_type=jnp.float32).reshape(Bt, Tp, H)

    # dec = W_s(s_t) + b_s was hoisted to the wrapper (one dense gemm for the
    # whole batch); here it is just a broadcast add over the time axis.
    et = jnp.tanh(et + dec_ref[...][:, None, :])                # (Bt, Tp, H)

    # scores = <et, v> contracting the hidden (lane) axis: VPU multiply +
    # XLU lane-reduce; the freshly computed et tile is never transposed.
    scores = jnp.sum(et * v_ref[...], axis=-1, keepdims=True)   # (Bt, Tp, 1)

    # Mask padded time steps (t_true is static at trace time).
    if Tp != t_true:
        t_idx = jax.lax.broadcasted_iota(jnp.int32, (Bt, Tp, 1), 1)
        scores = jnp.where(t_idx < t_true, scores, -jnp.inf)

    # Softmax over the time (sublane) axis; the divide goes to the EUP slot.
    m = jnp.max(scores, axis=1, keepdims=True)                  # (Bt, 1, 1)
    e = jnp.exp(scores - m)                                     # (Bt, Tp, 1)
    denom = jnp.sum(e, axis=1, keepdims=True)                   # (Bt, 1, 1)
    at = e * pl.reciprocal(denom, approx=True)                  # (Bt, Tp, 1)

    # ct[b, :] = sum_t at[b, t] * prev[b, t, :]  (broadcast mul + sublane sum;
    # avoids per-batch M=1 matmuls on the MXU).
    ct = jnp.sum(at * prev.astype(jnp.float32), axis=1)         # (Bt, H)
    ct_ref[...] = ct.astype(ct_ref.dtype)                       # dense 2-D store


def decoder_attention_forward(s_t, prev_s, params, intra_decoder=True,
                              block_b=8):
    """Mirrors decoder_attention.forward; returns (ct_d, new_prev_s)."""
    if not intra_decoder:
        return jnp.zeros_like(s_t), prev_s
    if prev_s is None:
        return jnp.zeros_like(s_t), s_t[:, None, :]

    B, T, H = prev_s.shape

    # Hoisted out of the kernel: single dense (B,H)@(H,H) gemm for the s_t
    # projection, and a one-time transpose of W_prev.
    dec = (s_t @ params["W_s"].T + params["b_s"][None, :]).astype(jnp.float32)
    w_prev_t = params["W_prev"].T.astype(jnp.float32)           # (H, H)
    v = params["v"].astype(jnp.float32)                         # (1, H)

    # Batch-block the grid. Keep Bt either == B (full dim) or a multiple of 8
    # so the (Bt, H) blocks satisfy the (8, 128)/full-dim tiling rule.
    Bt = B if B <= block_b else _round_up(min(block_b, B), 8)
    n_blocks = pl.cdiv(B, Bt)
    Bp = n_blocks * Bt
    Tp = _round_up(T, 8)

    prev_pad, dec_pad = prev_s, dec
    if Bp != B or Tp != T:
        prev_pad = jnp.pad(prev_s, ((0, Bp - B), (0, Tp - T), (0, 0)))
        dec_pad = jnp.pad(dec, ((0, Bp - B), (0, 0)))

    kernel = functools.partial(intra_decoder_attn_kernel, t_true=T)

    ct = pl.pallas_call(
        kernel,
        out_shape=jax.ShapeDtypeStruct((Bp, H), s_t.dtype),
        grid_spec=pltpu.PrefetchScalarGridSpec(
            num_scalar_prefetch=0,
            grid=(n_blocks,),
            in_specs=[
                pl.BlockSpec((Bt, Tp, H), lambda b: (b, 0, 0)),  # prev_s
                pl.BlockSpec((Bt, H),     lambda b: (b, 0)),     # dec (hoisted)
                pl.BlockSpec((H, H),      lambda b: (0, 0)),     # W_prev.T
                pl.BlockSpec((1, H),      lambda b: (0, 0)),     # v
            ],
            out_specs=pl.BlockSpec((Bt, H), lambda b: (b, 0)),
        ),
        compiler_params=pltpu.CompilerParams(
            dimension_semantics=("parallel",),
            vmem_limit_bytes=32 * 1024 * 1024,
        ),
    )(prev_pad, dec_pad, w_prev_t, v)

    ct_d = ct[:B]

    # TODO(synk): in a real decode loop, keep prev_s (and its W_prev projection)
    # in a preallocated (B, T_max, H) cache updated in place via
    # dynamic_update_slice / input_output_aliases instead of concatenating each
    # step; the concat is kept here to preserve the module's stateless forward.
    new_prev_s = jnp.concatenate([prev_s, s_t[:, None, :]], axis=1)
    return ct_d, new_prev_s


def reference_forward(s_t, prev_s, params):
    """Pure-JAX reference of the PyTorch forward (prev_s not None branch)."""
    et = prev_s @ params["W_prev"].T                            # (B, T, H)
    dec = s_t @ params["W_s"].T + params["b_s"]                 # (B, H)
    et = jnp.tanh(et + dec[:, None, :])                         # (B, T, H)
    et = (et @ params["v"].T)[..., 0]                           # (B, T)
    at = jax.nn.softmax(et, axis=1)                             # (B, T)
    ct = jnp.einsum("bt,bth->bh", at, prev_s)                   # (B, H)
    return ct


if __name__ == "__main__":
    B, T, H = 2, 8, 32                                          # batch, history, hidden_dim

    key = jax.random.PRNGKey(0)
    k1, k2, k3, k4, k5, k6 = jax.random.split(key, 6)
    params = {
        "W_prev": 0.1 * jax.random.normal(k1, (H, H), jnp.float32),
        "W_s":    0.1 * jax.random.normal(k2, (H, H), jnp.float32),
        "b_s":    0.1 * jax.random.normal(k3, (H,),   jnp.float32),
        "v":      0.1 * jax.random.normal(k4, (1, H), jnp.float32),
    }
    s_t = jax.random.normal(k5, (B, H), jnp.float32)
    prev_s = jax.random.normal(k6, (B, T, H), jnp.float32)

    # Branch 1: first decoding step (prev_s is None) -> zeros + seeded history.
    ct0, hist0 = decoder_attention_forward(s_t, None, params)

    # Branch 2: intra-decoder attention over existing history (the hot path).
    ct_d, new_prev_s = decoder_attention_forward(s_t, prev_s, params)
    jax.block_until_ready((ct0, hist0, ct_d, new_prev_s))

    # Correctness check against the pure-JAX reference. Tolerance loosened
    # slightly because the softmax normalization uses the approximate EUP
    # reciprocal (relative error ~2^-12).
    ct_ref = reference_forward(s_t, prev_s, params)
    assert ct_d.shape == (B, H)
    assert new_prev_s.shape == (B, T + 1, H)
    assert jnp.allclose(ct0, 0.0)
    assert jnp.allclose(new_prev_s[:, :T], prev_s)
    assert jnp.allclose(new_prev_s[:, T], s_t)
    assert jnp.allclose(ct_d, ct_ref, atol=2e-3, rtol=2e-3)

    print("KERNEL_OK")
</pallas_src>

<mosaic_0001>
module attributes {stable_mosaic.version = 11 : i64} {
  func.func @intra_decoder_attn_kernel(%arg0: i32, %arg1: memref<2x8x32xf32, #tpu.memory_space<vmem>>, %arg2: memref<2x32xf32, #tpu.memory_space<vmem>>, %arg3: memref<32x32xf32, #tpu.memory_space<vmem>>, %arg4: memref<1x32xf32, #tpu.memory_space<vmem>>, %arg5: memref<2x32xf32, #tpu.memory_space<vmem>>) attributes {dimension_semantics = [#tpu.dimension_semantics<parallel>], iteration_bounds = array<i64: 1>, scalar_prefetch = 0 : i64, scratch_operands = 0 : i64, tpu.core_type = #tpu.core_type<tc>, window_params = [{transform_indices = @transform_0, window_bounds = array<i64: 2, 8, 32>}, {transform_indices = @transform_1, window_bounds = array<i64: 2, 32>}, {pipeline_mode = #tpu.pipeline_mode<synchronous>, transform_indices = @transform_2, window_bounds = array<i64: 32, 32>}, {pipeline_mode = #tpu.pipeline_mode<synchronous>, transform_indices = @transform_3, window_bounds = array<i64: 1, 32>}, {transform_indices = @transform_4, window_bounds = array<i64: 2, 32>}]} {
    %c0 = arith.constant 0 : index
    %c0_0 = arith.constant 0 : index
    %c0_1 = arith.constant 0 : index
    %0 = vector.load %arg1[%c0, %c0_0, %c0_1] : memref<2x8x32xf32, #tpu.memory_space<vmem>>, vector<2x8x32xf32>
    %1 = vector.shape_cast %0 : vector<2x8x32xf32> to vector<16x32xf32>
    %c0_2 = arith.constant 0 : index
    %c0_3 = arith.constant 0 : index
    %2 = vector.load %arg3[%c0_2, %c0_3] : memref<32x32xf32, #tpu.memory_space<vmem>>, vector<32x32xf32>
    %cst = arith.constant dense<0.000000e+00> : vector<16x32xf32>
    %3 = tpu.matmul %1, %2, %cst {dimension_numbers = #tpu.dot_dimension_numbers<[1], [0], [0], [1], [0, 0, 1, 1], [], []>} : vector<16x32xf32>, vector<32x32xf32>, vector<16x32xf32> -> vector<16x32xf32>
    %4 = vector.shape_cast %3 : vector<16x32xf32> to vector<2x8x32xf32>
    %c0_4 = arith.constant 0 : index
    %c0_5 = arith.constant 0 : index
    %5 = vector.load %arg2[%c0_4, %c0_5] : memref<2x32xf32, #tpu.memory_space<vmem>>, vector<2x32xf32>
    %6 = vector.shape_cast %5 : vector<2x32xf32> to vector<2x1x32xf32>
    %7 = vector.broadcast %6 : vector<2x1x32xf32> to vector<2x8x32xf32>
    %8 = arith.addf %4, %7 : vector<2x8x32xf32>
    %9 = math.tanh %8 : vector<2x8x32xf32>
    %c0_6 = arith.constant 0 : index
    %c0_7 = arith.constant 0 : index
    %10 = vector.load %arg4[%c0_6, %c0_7] : memref<1x32xf32, #tpu.memory_space<vmem>>, vector<1x32xf32>
    %11 = vector.shape_cast %10 : vector<1x32xf32> to vector<1x1x32xf32>
    %12 = vector.broadcast %11 : vector<1x1x32xf32> to vector<2x8x32xf32>
    %13 = arith.mulf %9, %12 : vector<2x8x32xf32>
    %cst_8 = arith.constant dense<0.000000e+00> : vector<2x8xf32>
    %14 = vector.multi_reduction <add>, %13, %cst_8 [2] : vector<2x8x32xf32> to vector<2x8xf32>
    %15 = vector.shape_cast %14 : vector<2x8xf32> to vector<2x8x1xf32>
    %cst_9 = arith.constant dense<0xFF800000> : vector<2x1xf32>
    %16 = vector.multi_reduction <maximumf>, %15, %cst_9 [1] : vector<2x8x1xf32> to vector<2x1xf32>
    %17 = vector.shape_cast %16 : vector<2x1xf32> to vector<2x1x1xf32>
    %18 = vector.broadcast %17 : vector<2x1x1xf32> to vector<2x8x1xf32>
    %19 = arith.subf %15, %18 : vector<2x8x1xf32>
    %20 = math.exp %19 : vector<2x8x1xf32>
    %cst_10 = arith.constant dense<0.000000e+00> : vector<2x1xf32>
    %21 = vector.multi_reduction <add>, %20, %cst_10 [1] : vector<2x8x1xf32> to vector<2x1xf32>
    %22 = vector.shape_cast %21 : vector<2x1xf32> to vector<2x1x1xf32>
    %23 = tpu.reciprocal %22 {approx = true} : vector<2x1x1xf32> -> vector<2x1x1xf32>
    %24 = vector.broadcast %23 : vector<2x1x1xf32> to vector<2x8x1xf32>
    %25 = arith.mulf %20, %24 : vector<2x8x1xf32>
    %26 = vector.broadcast %25 : vector<2x8x1xf32> to vector<2x8x32xf32>
    %27 = arith.mulf %26, %0 : vector<2x8x32xf32>
    %cst_11 = arith.constant dense<0.000000e+00> : vector<2x32xf32>
    %28 = vector.multi_reduction <add>, %27, %cst_11 [1] : vector<2x8x32xf32> to vector<2x32xf32>
    %c0_12 = arith.constant 0 : index
    %c0_13 = arith.constant 0 : index
    %29 = vector.load %arg5[%c0_12, %c0_13] : memref<2x32xf32, #tpu.memory_space<vmem>>, vector<2x32xf32>
    tpu.vector_store %arg5[%c0_12, %c0_13], %28 {strides = array<i32>} : memref<2x32xf32, #tpu.memory_space<vmem>>, vector<2x32xf32>,
    return
  }
  func.func @transform_0(%arg0: i32) -> (i32, i32, i32) {
    %c0_i32 = arith.constant 0 : i32
    %c0_i32_0 = arith.constant 0 : i32
    %c0_i32_1 = arith.constant 0 : i32
    return %arg0, %c0_i32, %c0_i32_0 : i32, i32, i32
  }
  func.func @transform_1(%arg0: i32) -> (i32, i32) {
    %c0_i32 = arith.constant 0 : i32
    %c0_i32_0 = arith.constant 0 : i32
    return %arg0, %c0_i32 : i32, i32
  }
  func.func @transform_2(%arg0: i32) -> (i32, i32) {
    %c0_i32 = arith.constant 0 : i32
    %c0_i32_0 = arith.constant 0 : i32
    %c0_i32_1 = arith.constant 0 : i32
    return %c0_i32, %c0_i32_0 : i32, i32
  }
  func.func @transform_3(%arg0: i32) -> (i32, i32) {
    %c0_i32 = arith.constant 0 : i32
    %c0_i32_0 = arith.constant 0 : i32
    %c0_i32_1 = arith.constant 0 : i32
    return %c0_i32, %c0_i32_0 : i32, i32
  }
  func.func @transform_4(%arg0: i32) -> (i32, i32) {
    %c0_i32 = arith.constant 0 : i32
    %c0_i32_0 = arith.constant 0 : i32
    return %arg0, %c0_i32 : i32, i32
  }
}

</mosaic_0001>

<llo_original>
// kernel: tpu_custom_call.1
$region0: #{tpu_custom_call.1}
  #allocation0 [shape = 'u32[]', space=smem, size = 0x4, offset = 0x4, fixed_abs, tag = 'smem constant byte address 0x4 - core index']
  #allocation1 [shape = 'u32[72,128]{1,0:T(1,128)}', space=vmem, size = 0x9000, scoped, tag = 'internal scratch']
  %s0 = inlined_call_operand.hbm [shape: f32[2,8,32], index: 0, kind: input, shape index: {}]
  %s1 = inlined_call_operand.hbm [shape: f32[2,32], index: 1, kind: input, shape index: {}]
  %s2 = inlined_call_operand.hbm [shape: f32[32,32], index: 2, kind: input, shape index: {}]
  %s3 = inlined_call_operand.vmem [shape: f32[1,32], index: 3, kind: input, shape index: {}]
  %s4 = inlined_call_operand.hbm [shape: f32[2,32], index: 4, kind: output, shape index: {}]
  %s5 = sld [smem:[#allocation0]]
  $region38: #{tpu_custom_call.1} parent=0
    _
  %s7 = ssub.s32 1, %s5
  %s8 = scalar_select 0, %s7, %s5
  $region1: #{tpu_custom_call.1} parent=0
    #allocation2 [shape = 'u8[8192]{0}', space=vmem, size = 0x2000, scoped, tag = 'input window, operand 0, single buffered']
    #allocation3 [shape = 's32[1]{0}', space=sflag, size = 0x4, scoped, tag = 'scoped memory for tpu_custom_call.1']
    #allocation4 [shape = 's32[1]{0}', space=sflag, size = 0x4, scoped, tag = 'scoped memory for tpu_custom_call.1']
    #allocation5 [shape = 'u8[1024]{0}', space=vmem, size = 0x400, scoped, tag = 'input window, operand 1, single buffered']
    #allocation6 [shape = 's32[1]{0}', space=sflag, size = 0x4, scoped, tag = 'scoped memory for tpu_custom_call.1']
    #allocation7 [shape = 'u8[16384]{0}', space=vmem, size = 0x4000, scoped, tag = 'input window, operand 2, single buffered']
    #allocation8 [shape = 'u8[1024]{0}', space=vmem, size = 0x400, scoped, tag = 'output window, operand 0, single buffered']
    %9 = vsyncpa [#allocation3], 0
    %10 = vsyncpa [#allocation6], 0
    %11 = vsyncpa [#allocation4], 0
    // Predicated region
    $region2: #{tpu_custom_call.1} parent=1 // pred_check
      _
    $region3: #{tpu_custom_call.1} parent=1 // pred_check_branch
      %13 = sbr.rel (0) target = $region5
    $region4: #{tpu_custom_call.1} parent=1 // pred_region
      %15 = vsyncadd [#allocation3], 0
      %s16 = sshll.u32 %s0, 4
      %s17 = int_to_ptr.hbm [resolvable:$true] %s16
      %s18 = sshll.u32 [#allocation2], 4
      %s19 = int_to_ptr.vmem [resolvable:$true] %s18
      %24 = dma.hbm_to_vmem [thread:$0]  %s17, 256, %s19, [#allocation3], 128, 128, 8
    $region5: #{tpu_custom_call.1} parent=1 // pred_fallthru
      _
    // Predicated region
    $region6: #{tpu_custom_call.1} parent=1 // pred_check
      _
    $region7: #{tpu_custom_call.1} parent=1 // pred_check_branch
      %26 = sbr.rel (0) target = $region9
    $region8: #{tpu_custom_call.1} parent=1 // pred_region
      %28 = vsyncadd [#allocation6], 0
      %s30 = sshll.u32 %s1, 4
      %s31 = int_to_ptr.hbm [resolvable:$true] %s30
      %s32 = sshll.u32 [#allocation5], 4
      %s33 = int_to_ptr.vmem [resolvable:$true] %s32
      %35 = dma.hbm_to_vmem [thread:$0]  %s31, 32, %s33, [#allocation6]
    $region9: #{tpu_custom_call.1} parent=1 // pred_fallthru
      _
    // Predicated region
    $region10: #{tpu_custom_call.1} parent=1 // pred_check
      _
    $region11: #{tpu_custom_call.1} parent=1 // pred_check_branch
      %37 = sbr.rel (0) target = $region13
    $region12: #{tpu_custom_call.1} parent=1 // pred_region
      %39 = vsyncadd [#allocation6], 0
      %s40 = sshll.u32 %s2, 4
      %s41 = int_to_ptr.hbm [resolvable:$true] %s40
      %s42 = sshll.u32 [#allocation7], 4
      %s43 = int_to_ptr.vmem [resolvable:$true] %s42
      %48 = dma.hbm_to_vmem [thread:$0]  %s41, 512, %s43, [#allocation6], 128, 128, 8
    $region13: #{tpu_custom_call.1} parent=1 // pred_fallthru
      _
    // Predicated region
    $region14: #{tpu_custom_call.1} parent=1 // pred_check
      _
    $region15: #{tpu_custom_call.1} parent=1 // pred_check_branch
      %50 = sbr.rel (0) target = $region17
    $region16: #{tpu_custom_call.1} parent=1 // pred_region
      _
    $region17: #{tpu_custom_call.1} parent=1 // pred_fallthru
      _
    // Predicated region
    $region18: #{tpu_custom_call.1} parent=1 // pred_check
      _
    $region19: #{tpu_custom_call.1} parent=1 // pred_check_branch
      %52 = sbr.rel (0) target = $region21
    $region20: #{tpu_custom_call.1} parent=1 // pred_region
      %54 = dma.done [#allocation3], 256
    $region21: #{tpu_custom_call.1} parent=1 // pred_fallthru
      _
    // Predicated region
    $region22: #{tpu_custom_call.1} parent=1 // pred_check
      _
    $region23: #{tpu_custom_call.1} parent=1 // pred_check_branch
      %56 = sbr.rel (0) target = $region25
    $region24: #{tpu_custom_call.1} parent=1 // pred_region
      %58 = dma.done [#allocation6], 32
    $region25: #{tpu_custom_call.1} parent=1 // pred_fallthru
      _
    // Predicated region
    $region26: #{tpu_custom_call.1} parent=1 // pred_check
      _
    $region27: #{tpu_custom_call.1} parent=1 // pred_check_branch
      %60 = sbr.rel (0) target = $region29
    $region28: #{tpu_custom_call.1} parent=1 // pred_region
      %62 = dma.done [#allocation6], 512
    $region29: #{tpu_custom_call.1} parent=1 // pred_fallthru
      _
    %v63 = vld [vmem:[#allocation2] sm:$0xff]
    %v64 = vld [vmem:[#allocation2 + $0x8] sm:$0xff]
    %v65 = vld [vmem:[#allocation7] sm:$0xff]
    %v66 = vld [vmem:[#allocation7 + $0x8] sm:$0xff]
    %v67 = vld [vmem:[#allocation7 + $0x10] sm:$0xff]
    %v68 = vld [vmem:[#allocation7 + $0x18] sm:$0xff]
    %vm69 = vcmask 261120
    %v71 = vsel %vm69, %v63, 0
    %v74 = vsel %vm69, %v64, 0
    %76 = vmatpush.msra.mxu0 0.0
    %77 = vmatpush.msra.mxu0 0.0
    %78 = vmatpush.msra.mxu0 0.0
    %79 = vmatpush.msra.mxu0 0.0
    %80 = vmatpush.msra.mxu0 0.0
    %81 = vmatpush.msra.mxu0 0.0
    %82 = vmatpush.msra.mxu0 0.0
    %83 = vmatpush.msra.mxu0 0.0
    %84 = vmatpush.msra.mxu0 0.0
    %85 = vmatpush.msra.mxu0 0.0
    %86 = vmatpush.msra.mxu0 0.0
    %87 = vmatpush.msra.mxu0 0.0
    %88 = vmatpush.msra.mxu0 %v68
    %89 = vmatpush.msra.mxu0 %v67
    %90 = vmatpush.msra.mxu0 %v66
    %91 = vmatpush.msra.mxu0 %v65
    %92 = vmatmul.f32.gmra.mxu0 %v71
    %v93 = vpop.f32.mrf.mxu0
    %v94 = vadd.f32 0.0, %v93
    %95 = vmatmul.f32.gmra.mxu0 %v74
    %v96 = vpop.f32.mrf.mxu0
    %v97 = vadd.f32 0.0, %v96
    %98 = vdwg.mxu0
    %v99 = vld [vmem:[#allocation5] sm:$0x3]
    %v101 = vrot.slane %v99, 1
    %v102 = vperm.slane %v99, 0
    %v103 = vperm.slane %v101, 0
    %v106 = vadd.f32 %v94, %v102
    %v107 = vadd.f32 %v97, %v103
    %v108 = vtanh.pop %v106
    %v109 = vtanh.pop %v107
    %v110 = vld [vmem:[%s3] sm:$0x1]
    %v112 = vperm.slane %v110, 0
    %v114 = vmul.f32 %v108, %v112
    %v115 = vmul.f32 %v109, %v112
    %v116 = vsel %vm69, %v114, 0.0
    %117 = vadd.xlane.f32.xlu0 %v116
    %v118 = vpop.xlane.xlu0 %117
    %v119 = vsel %vm69, %v115, 0.0
    %120 = vadd.xlane.f32.xlu0 %v119
    %v121 = vpop.xlane.xlu0 %120
    %v122 = vrot.slane %v118, 4
    %v123 = vmax.f32 %v118, %v122
    %v124 = vrot.slane %v123, 2
    %v125 = vmax.f32 %v123, %v124
    %v126 = vrot.slane %v125, 1
    %v127 = vmax.f32 %v125, %v126
    %v128 = vrot.slane %v121, 4
    %v129 = vmax.f32 %v121, %v128
    %v130 = vrot.slane %v129, 2
    %v131 = vmax.f32 %v129, %v130
    %v132 = vrot.slane %v131, 1
    %v133 = vmax.f32 %v131, %v132
    %v134 = vsub.f32 %v118, %v127
    %v135 = vsub.f32 %v121, %v133
    %v136 = vmul.f32 %v134, 1.442695
    %v137 = vpow.pop %v136
    %v138 = vmul.f32 %v135, 1.442695
    %v139 = vpow.pop %v138
    %v140 = vrot.slane %v137, 4
    %v141 = vadd.f32 %v137, %v140
    %v142 = vrot.slane %v141, 2
    %v143 = vadd.f32 %v141, %v142
    %v144 = vrot.slane %v143, 1
    %v145 = vadd.f32 %v143, %v144
    %v146 = vrot.slane %v139, 4
    %v147 = vadd.f32 %v139, %v146
    %v148 = vrot.slane %v147, 2
    %v149 = vadd.f32 %v147, %v148
    %v150 = vrot.slane %v149, 1
    %v151 = vadd.f32 %v149, %v150
    %v152 = vrcp.pop %v145
    %v153 = vrcp.pop %v151
    %v154 = vmul.f32 %v137, %v152
    %v155 = vmul.f32 %v139, %v153
    %v156 = vmul.f32 %v154, %v63
    %v157 = vmul.f32 %v155, %v64
    %v158 = vsel %vm69, %v156, 0.0
    %v159 = vrot.slane %v158, 4
    %v160 = vadd.f32 %v158, %v159
    %v161 = vrot.slane %v160, 2
    %v162 = vadd.f32 %v160, %v161
    %v163 = vrot.slane %v162, 1
    %v164 = vadd.f32 %v162, %v163
    %v165 = vsel %vm69, %v157, 0.0
    %v166 = vrot.slane %v165, 4
    %v167 = vadd.f32 %v165, %v166
    %v168 = vrot.slane %v167, 2
    %v169 = vadd.f32 %v167, %v168
    %v170 = vrot.slane %v169, 1
    %v171 = vadd.f32 %v169, %v170
    %vm174 = vcmask 1041409
    %v175 = vsel %vm174, %v171, %v164
    %vm177 = vcmask 254976
    %178 = vst.msk [vmem:[#allocation8] sm:$0x3] %vm177, %v175
    // Predicated region
    $region30: #{tpu_custom_call.1} parent=1 // pred_check
      _
    $region31: #{tpu_custom_call.1} parent=1 // pred_check_branch
      %180 = sbr.rel (0) target = $region33
    $region32: #{tpu_custom_call.1} parent=1 // pred_region
      %182 = vsyncadd [#allocation4], 0
      %s184 = sshll.u32 [#allocation8], 4
      %s185 = int_to_ptr.vmem [resolvable:$true] %s184
      %s186 = sshll.u32 %s4, 4
      %s187 = int_to_ptr.hbm [resolvable:$true] %s186
      %189 = dma.vmem_to_hbm [thread:$0]  %s185, 32, %s187, [#allocation4]
    $region33: #{tpu_custom_call.1} parent=1 // pred_fallthru
      _
    // Predicated region
    $region34: #{tpu_custom_call.1} parent=1 // pred_check
      _
    $region35: #{tpu_custom_call.1} parent=1 // pred_check_branch
      %191 = sbr.rel (0) target = $region37
    $region36: #{tpu_custom_call.1} parent=1 // pred_region
      %193 = dma.done [#allocation4], 32
    $region37: #{tpu_custom_call.1} parent=1 // pred_fallthru
      _
    %194 = vsyncpa [#allocation3], 1
    %195 = vsyncpa [#allocation6], 1
    %196 = vsyncpa [#allocation4], 1

</llo_original>
